<compile_context>
chip_gen: v5e
topology: v5e:2x2
jax: 0.10.0
libtpu: 0.0.40
codegen_flags: <defaults>
</compile_context>

<pallas_src>
import math

import jax
import jax.numpy as jnp
from jax.experimental import pallas as pl
from jax.experimental.pallas import tpu as pltpu

LANE = 128      # lane width (last dim granularity)
SUBLANE = 8     # sublane granularity (second-to-last dim)


def _round_up(x: int, m: int) -> int:
    return (x + m - 1) // m * m


def mlp_kernel(x_ref, w1_ref, w2_ref, o_ref):
    # Fused: lin1 -> relu -> lin2, all on the current row tile. f32 accumulation on MXU.
    h = jnp.dot(x_ref[...], w1_ref[...], preferred_element_type=jnp.float32)
    h = jnp.maximum(h, 0.0).astype(w2_ref.dtype)          # keep MXU inputs in compute dtype
    o_ref[...] = jnp.dot(h, w2_ref[...],
                         preferred_element_type=jnp.float32).astype(o_ref.dtype)


def prepare_weights(w1, w2, *, compute_dtype=jnp.float32):
    """Transpose + lane-pad PyTorch-layout weights ONCE (do this outside the hot loop).

    w1: (H, D_in)  ->  (D_in_pad, H_pad)   zero-padded
    w2: (D_out, H) ->  (H_pad, D_out_pad)  zero-padded
    Zero padding is exact: padded hidden columns have zero weights, relu(0)=0, padded
    input/output columns contribute / receive zeros.
    """
    H, D_in = w1.shape
    D_out, H2 = w2.shape
    assert H2 == H
    D_in_p, H_p, D_out_p = _round_up(D_in, LANE), _round_up(H, LANE), _round_up(D_out, LANE)

    w1_t = jnp.zeros((D_in_p, H_p), compute_dtype).at[:D_in, :H].set(
        w1.T.astype(compute_dtype))
    w2_t = jnp.zeros((H_p, D_out_p), compute_dtype).at[:H, :D_out].set(
        w2.T.astype(compute_dtype))
    return w1_t, w2_t


def mlp_scaled_forward_prepared(x, w1_t_pad, w2_t_pad, output_dim, *,
                                row_tile=256, compute_dtype=jnp.float32):
    """Forward with pre-transposed / pre-padded weights (no per-call weight transpose)."""
    B, S, D_in = x.shape
    M = B * S
    out_dtype = x.dtype

    D_in_p, H_p = w1_t_pad.shape
    H_p2, D_out_p = w2_t_pad.shape
    assert H_p2 == H_p and D_in <= D_in_p and output_dim <= D_out_p

    # --- row tiling: big tiles for MXU utilization, clamped for tiny inputs, and kept
    # --- to >= 2 grid steps when possible so both v7x TensorCores get work.
    rt = min(row_tile, _round_up(M, SUBLANE))
    if pl.cdiv(M, rt) < 2 and rt > SUBLANE:
        rt = max(SUBLANE, _round_up(pl.cdiv(M, 2), SUBLANE))
    M_p = _round_up(M, rt)
    grid = (M_p // rt,)

    # --- pad x to (M_p, D_in_p): lane-dense feature dim, tail rows zero.
    x_pad = jnp.zeros((M_p, D_in_p), compute_dtype).at[:M, :D_in].set(
        x.reshape(M, D_in).astype(compute_dtype))

    itemsize = jnp.dtype(compute_dtype).itemsize
    # VMEM footprint: 2x-buffered x tile + single-buffered weights + 2x-buffered out tile
    # + f32 intermediate h tile; set the scoped limit with 2x headroom (capped at 64 MiB,
    # safe on every generation incl. v7x).
    vmem_est = (2 * rt * D_in_p * itemsize
                + D_in_p * H_p * itemsize
                + H_p * D_out_p * itemsize
                + 2 * rt * D_out_p * 4
                + rt * H_p * 4)
    vmem_limit = int(min(max(2 * vmem_est, 32 << 20), 64 << 20))

    flops = 2 * M_p * (D_in_p * H_p + H_p * D_out_p)
    bytes_accessed = ((x_pad.size + w1_t_pad.size + w2_t_pad.size) * itemsize
                      + M_p * D_out_p * jnp.dtype(out_dtype).itemsize)

    out2d = pl.pallas_call(
        mlp_kernel,
        out_shape=jax.ShapeDtypeStruct((M_p, D_out_p), out_dtype),
        grid_spec=pltpu.PrefetchScalarGridSpec(
            num_scalar_prefetch=0,
            grid=grid,
            in_specs=[
                # Row tile of activations: streamed (default double-buffered).
                pl.BlockSpec((rt, D_in_p), lambda i: (i, 0)),
                # Grid-invariant weights: single-buffered -> half the weight VMEM.
                pl.BlockSpec((D_in_p, H_p), lambda i: (0, 0),
                             pipeline_mode=pl.Buffered(1)),
                pl.BlockSpec((H_p, D_out_p), lambda i: (0, 0),
                             pipeline_mode=pl.Buffered(1)),
            ],
            out_specs=pl.BlockSpec((rt, D_out_p), lambda i: (i, 0)),
        ),
        compiler_params=pltpu.CompilerParams(
            dimension_semantics=("parallel",),
            vmem_limit_bytes=vmem_limit,
        ),
        cost_estimate=pl.CostEstimate(flops=flops, transcendentals=0,
                                      bytes_accessed=bytes_accessed),
    )(x_pad, w1_t_pad, w2_t_pad)

    return out2d[:M, :output_dim].reshape(B, S, output_dim)


def mlp_scaled_forward(x, w1, w2, *, row_tile=256, compute_dtype=jnp.float32):
    """Convenience wrapper taking raw PyTorch-layout weights.

    x: (B, S, D_in); w1: (H, D_in); w2: (D_out, H).
    For repeated calls, call `prepare_weights` once and use
    `mlp_scaled_forward_prepared` to avoid re-transposing the weights every step.
    """
    D_out = w2.shape[0]
    w1_t, w2_t = prepare_weights(w1, w2, compute_dtype=compute_dtype)
    return mlp_scaled_forward_prepared(x, w1_t, w2_t, D_out,
                                       row_tile=row_tile, compute_dtype=compute_dtype)


def reference_forward(x, w1, w2):
    h = jnp.maximum(jnp.einsum("bsd,hd->bsh", x, w1), 0.0)
    return jnp.einsum("bsh,oh->bso", h, w2)


if __name__ == "__main__":
    # Small shapes consistent with the module's (batch, seq, input_dim) input.
    batch, seq, input_dim, hidden_dim, output_dim = 2, 8, 32, 64, 32

    key = jax.random.PRNGKey(0)
    kx, k1, k2 = jax.random.split(key, 3)

    x = jax.random.normal(kx, (batch, seq, input_dim), dtype=jnp.float32)
    # Deterministic synthetic weights (PyTorch nn.Linear layout: (out, in)).
    bound1 = 1.0 / math.sqrt(input_dim)
    bound2 = 1.0 / math.sqrt(hidden_dim)
    w1 = jax.random.uniform(k1, (hidden_dim, input_dim), dtype=jnp.float32,
                            minval=-bound1, maxval=bound1)
    w2 = jax.random.uniform(k2, (output_dim, hidden_dim), dtype=jnp.float32,
                            minval=-bound2, maxval=bound2)

    ref = reference_forward(x, w1, w2)

    # 1) f32 compute path — matches the PyTorch module's f32 numerics.
    out = jax.block_until_ready(mlp_scaled_forward(x, w1, w2))
    assert out.shape == (batch, seq, output_dim)
    assert jnp.allclose(out, ref, atol=1e-5, rtol=1e-5)

    # 2) bf16 MXU path (roughly 3x MXU throughput, f32 accumulation) — looser tolerance.
    out_bf16 = jax.block_until_ready(
        mlp_scaled_forward(x, w1, w2, compute_dtype=jnp.bfloat16))
    assert out_bf16.shape == (batch, seq, output_dim)
    assert jnp.allclose(out_bf16, ref, atol=3e-2, rtol=3e-2)

    print("KERNEL_OK")
</pallas_src>

<mosaic_0001>
module attributes {stable_mosaic.version = 11 : i64} {
  func.func @mlp_kernel(%arg0: i32, %arg1: memref<8x128xf32, #tpu.memory_space<vmem>>, %arg2: memref<128x128xf32, #tpu.memory_space<vmem>>, %arg3: memref<128x128xf32, #tpu.memory_space<vmem>>, %arg4: memref<8x128xf32, #tpu.memory_space<vmem>>) attributes {dimension_semantics = [#tpu.dimension_semantics<parallel>], iteration_bounds = array<i64: 2>, scalar_prefetch = 0 : i64, scratch_operands = 0 : i64, tpu.core_type = #tpu.core_type<tc>, window_params = [{transform_indices = @transform_0, window_bounds = array<i64: 8, 128>}, {pipeline_mode = #tpu.pipeline_mode<synchronous>, transform_indices = @transform_1, window_bounds = array<i64: 128, 128>}, {pipeline_mode = #tpu.pipeline_mode<synchronous>, transform_indices = @transform_2, window_bounds = array<i64: 128, 128>}, {transform_indices = @transform_3, window_bounds = array<i64: 8, 128>}]} {
    %c0 = arith.constant 0 : index
    %c0_0 = arith.constant 0 : index
    %0 = vector.load %arg1[%c0, %c0_0] : memref<8x128xf32, #tpu.memory_space<vmem>>, vector<8x128xf32>
    %c0_1 = arith.constant 0 : index
    %c0_2 = arith.constant 0 : index
    %1 = vector.load %arg2[%c0_1, %c0_2] : memref<128x128xf32, #tpu.memory_space<vmem>>, vector<128x128xf32>
    %cst = arith.constant dense<0.000000e+00> : vector<8x128xf32>
    %2 = tpu.matmul %0, %1, %cst {dimension_numbers = #tpu.dot_dimension_numbers<[1], [0], [0], [1], [0, 0, 1, 1], [], []>} : vector<8x128xf32>, vector<128x128xf32>, vector<8x128xf32> -> vector<8x128xf32>
    %cst_3 = arith.constant 0.000000e+00 : f32
    %3 = vector.broadcast %cst_3 : f32 to vector<8x128xf32>
    %4 = arith.maximumf %2, %3 : vector<8x128xf32>
    %c0_4 = arith.constant 0 : index
    %c0_5 = arith.constant 0 : index
    %5 = vector.load %arg3[%c0_4, %c0_5] : memref<128x128xf32, #tpu.memory_space<vmem>>, vector<128x128xf32>
    %cst_6 = arith.constant dense<0.000000e+00> : vector<8x128xf32>
    %6 = tpu.matmul %4, %5, %cst_6 {dimension_numbers = #tpu.dot_dimension_numbers<[1], [0], [0], [1], [0, 0, 1, 1], [], []>} : vector<8x128xf32>, vector<128x128xf32>, vector<8x128xf32> -> vector<8x128xf32>
    %c0_7 = arith.constant 0 : index
    %c0_8 = arith.constant 0 : index
    %7 = vector.load %arg4[%c0_7, %c0_8] : memref<8x128xf32, #tpu.memory_space<vmem>>, vector<8x128xf32>
    tpu.vector_store %arg4[%c0_7, %c0_8], %6 {strides = array<i32>} : memref<8x128xf32, #tpu.memory_space<vmem>>, vector<8x128xf32>,
    return
  }
  func.func @transform_0(%arg0: i32) -> (i32, i32) {
    %c0_i32 = arith.constant 0 : i32
    %c0_i32_0 = arith.constant 0 : i32
    return %arg0, %c0_i32 : i32, i32
  }
  func.func @transform_1(%arg0: i32) -> (i32, i32) {
    %c0_i32 = arith.constant 0 : i32
    %c0_i32_0 = arith.constant 0 : i32
    %c0_i32_1 = arith.constant 0 : i32
    return %c0_i32, %c0_i32_0 : i32, i32
  }
  func.func @transform_2(%arg0: i32) -> (i32, i32) {
    %c0_i32 = arith.constant 0 : i32
    %c0_i32_0 = arith.constant 0 : i32
    %c0_i32_1 = arith.constant 0 : i32
    return %c0_i32, %c0_i32_0 : i32, i32
  }
  func.func @transform_3(%arg0: i32) -> (i32, i32) {
    %c0_i32 = arith.constant 0 : i32
    %c0_i32_0 = arith.constant 0 : i32
    return %arg0, %c0_i32 : i32, i32
  }
}

</mosaic_0001>

<llo_original>
// kernel: tpu_custom_call.1
$region0: #{tpu_custom_call.1}
  #allocation0 [shape = 'u32[]', space=smem, size = 0x4, offset = 0x4, fixed_abs, tag = 'smem constant byte address 0x4 - core index']
  #allocation1 [shape = 'u32[72,128]{1,0:T(1,128)}', space=vmem, size = 0x9000, scoped, tag = 'internal scratch']
  %s0 = inlined_call_operand.hbm [shape: f32[16,128], index: 0, kind: input, shape index: {}]
  %s1 = inlined_call_operand.hbm [shape: f32[128,128], index: 1, kind: input, shape index: {}]
  %s2 = inlined_call_operand.hbm [shape: f32[128,128], index: 2, kind: input, shape index: {}]
  %s3 = inlined_call_operand.hbm [shape: f32[16,128], index: 3, kind: output, shape index: {}]
  %s4 = sld [smem:[#allocation0]]
  $region57: #{tpu_custom_call.1} parent=0
    _
  %s6 = ssub.s32 1, %s4
  %s7 = scalar_select 0, %s6, %s4
  $region1: #{tpu_custom_call.1} parent=0
    #allocation2 [shape = 'u8[8192]{0}', space=vmem, size = 0x2000, scoped, tag = 'input window, operand 0']
    #allocation3 [shape = 's32[2]{0}', space=sflag, size = 0x8, scoped, tag = 'scoped memory for tpu_custom_call.1']
    #allocation4 [shape = 's32[2]{0}', space=sflag, size = 0x8, scoped, tag = 'scoped memory for tpu_custom_call.1']
    #allocation5 [shape = 'u8[65536]{0}', space=vmem, size = 0x10000, scoped, tag = 'input window, operand 1, single buffered']
    #allocation6 [shape = 's32[1]{0}', space=sflag, size = 0x4, scoped, tag = 'scoped memory for tpu_custom_call.1']
    #allocation7 [shape = 'u8[65536]{0}', space=vmem, size = 0x10000, scoped, tag = 'input window, operand 2, single buffered']
    #allocation8 [shape = 'u8[8192]{0}', space=vmem, size = 0x2000, scoped, tag = 'output window, operand 0']
    %8 = vsyncpa [#allocation3], 0
    %s9 = scalar_lea.sflag [#allocation3], 1
    %10 = vsyncpa %s9, 0
    %11 = vsyncpa [#allocation6], 0
    %12 = vsyncpa [#allocation4], 0
    %s13 = scalar_lea.sflag [#allocation4], 1
    %14 = vsyncpa %s13, 0
    loop: start=0, step=1, limit=4
    $region2: #{tpu_custom_call.1} parent=1 // loop_pre_header
      _
    $region3: #{tpu_custom_call.1} parent=1 // loop_header
      %s16 = sphi 0, %s20
      %p17 = scmp.ge.s32.totalorder %s16, 4
      %s26 = sphi 0, %s28
      %s29 = sphi 0, %s26
      %s30 = sphi 0, %s29
      %s46 = sphi 0, %s30
      %s50 = sphi 0, %s50
      %s52 = sphi 0, %s50
      %s53 = sphi 0, %s52
      %s67 = sphi 0, %s53
      %s71 = sphi 0, %s71
      %s73 = sphi 0, %s71
      %s74 = sphi 0, %s73
      %s88 = sphi 0, %s74
      %s94 = sphi 0, %s96
      %s97 = sphi 0, %s94
      %s98 = sphi 0, %s97
      %s114 = sphi 0, %s98
    $region4: #{tpu_custom_call.1} parent=1 // loop_header_branch
      %19 = sbr.rel (%p17) target = $region8
    $region5: #{tpu_custom_call.1} parent=1 // loop_body
      %s21 = ssub.s32 %s16, 1
      %s22 = ssub.s32 %s16, 2
      %s23 = sadd.s32 %s16, 1
      %s24 = ssub.s32 %s16, %s23
      %p25 = scmp.eq.s32.totalorder %s24, 0
      %s27 = sadd.s32 %s26, 1
      %s28 = scalar_select %p25, %s26, %s27
      %p31 = pneg %p25
      %p32 = scmp.eq.s32.totalorder %s16, 1
      %p33 = por %p31, %p32
      %p34 = scmp.ne.s32.totalorder %s26, %s29
      %p35 = scmp.eq.s32.totalorder %s16, 0
      %p36 = por %p34, %p35
      %p37 = scmp.ne.s32.totalorder %s26, %s29
      %p38 = scmp.eq.s32.totalorder %s21, 1
      %p39 = por %p37, %p38
      %p40 = scmp.ne.s32.totalorder %s29, %s30
      %p41 = scmp.eq.s32.totalorder %s21, 0
      %p42 = por %p40, %p41
      %p43 = scmp.ne.s32.totalorder %s29, %s30
      %p44 = scmp.eq.s32.totalorder %s22, 1
      %p45 = por %p43, %p44
      %p47 = scmp.ne.s32.totalorder %s30, %s46
      %p48 = scmp.eq.s32.totalorder %s22, 0
      %p49 = por %p47, %p48
      %s51 = sadd.s32 %s50, 1
      %p54 = scmp.eq.s32.totalorder %s16, 1
      %p55 = scmp.ne.s32.totalorder %s50, %s52
      %p56 = scmp.eq.s32.totalorder %s16, 0
      %p57 = por %p55, %p56
      %p58 = scmp.ne.s32.totalorder %s50, %s52
      %p59 = scmp.eq.s32.totalorder %s21, 1
      %p60 = por %p58, %p59
      %p61 = scmp.ne.s32.totalorder %s52, %s53
      %p62 = scmp.eq.s32.totalorder %s21, 0
      %p63 = por %p61, %p62
      %p64 = scmp.ne.s32.totalorder %s52, %s53
      %p65 = scmp.eq.s32.totalorder %s22, 1
      %p66 = por %p64, %p65
      %p68 = scmp.ne.s32.totalorder %s53, %s67
      %p69 = scmp.eq.s32.totalorder %s22, 0
      %p70 = por %p68, %p69
      %s72 = sadd.s32 %s71, 1
      %p75 = scmp.eq.s32.totalorder %s16, 1
      %p76 = scmp.ne.s32.totalorder %s71, %s73
      %p77 = scmp.eq.s32.totalorder %s16, 0
      %p78 = por %p76, %p77
      %p79 = scmp.ne.s32.totalorder %s71, %s73
      %p80 = scmp.eq.s32.totalorder %s21, 1
      %p81 = por %p79, %p80
      %p82 = scmp.ne.s32.totalorder %s73, %s74
      %p83 = scmp.eq.s32.totalorder %s21, 0
      %p84 = por %p82, %p83
      %p85 = scmp.ne.s32.totalorder %s73, %s74
      %p86 = scmp.eq.s32.totalorder %s22, 1
      %p87 = por %p85, %p86
      %p89 = scmp.ne.s32.totalorder %s74, %s88
      %p90 = scmp.eq.s32.totalorder %s22, 0
      %p91 = por %p89, %p90
      %s92 = ssub.s32 %s16, %s23
      %p93 = scmp.eq.s32.totalorder %s92, 0
      %s95 = sadd.s32 %s94, 1
      %s96 = scalar_select %p93, %s94, %s95
      %p99 = pneg %p93
      %p100 = scmp.eq.s32.totalorder %s16, 1
      %p101 = por %p99, %p100
      %p102 = scmp.ne.s32.totalorder %s94, %s97
      %p103 = scmp.eq.s32.totalorder %s16, 0
      %p104 = por %p102, %p103
      %p105 = scmp.ne.s32.totalorder %s94, %s97
      %p106 = scmp.eq.s32.totalorder %s21, 1
      %p107 = por %p105, %p106
      %p108 = scmp.ne.s32.totalorder %s97, %s98
      %p109 = scmp.eq.s32.totalorder %s21, 0
      %p110 = por %p108, %p109
      %p111 = scmp.ne.s32.totalorder %s97, %s98
      %p112 = scmp.eq.s32.totalorder %s22, 1
      %p113 = por %p111, %p112
      %p115 = scmp.ne.s32.totalorder %s98, %s114
      %p116 = scmp.eq.s32.totalorder %s22, 0
      %p117 = por %p115, %p116
      %p118 = scmp.le.s32.totalorder 1, %s16
      %p119 = scmp.lt.s32.totalorder %s16, 3
      %p120 = pnand %p118, %p119
      %p121 = pneg %p120
      // Predicated region
      $region9: #{tpu_custom_call.1} parent=5 // pred_check
        _
      $region10: #{tpu_custom_call.1} parent=5 // pred_check_branch
        %123 = sbr.rel (%p120) target = $region12
      $region11: #{tpu_custom_call.1} parent=5 // pred_region
        %s124 = ssub.s32 %s16, 1
        // Predicated region
        $region13: #{tpu_custom_call.1} parent=11 // pred_check
          %p125 = pneg %p63
        $region14: #{tpu_custom_call.1} parent=11 // pred_check_branch
          %127 = sbr.rel (%p125) target = $region16
        $region15: #{tpu_custom_call.1} parent=11 // pred_region
          %129 = vsyncadd [#allocation6], 0
          %s130 = sshll.u32 %s1, 4
          %s131 = int_to_ptr.hbm [resolvable:$true] %s130
          %s132 = sshll.u32 [#allocation5], 4
          %s133 = int_to_ptr.vmem [resolvable:$true] %s132
          %138 = dma.hbm_to_vmem [thread:$0]  %s131, 2048, %s133, [#allocation6], 128, 128, 8
        $region16: #{tpu_custom_call.1} parent=11 // pred_fallthru
          _
        // Predicated region
        $region17: #{tpu_custom_call.1} parent=11 // pred_check
          %p139 = pneg %p84
        $region18: #{tpu_custom_call.1} parent=11 // pred_check_branch
          %141 = sbr.rel (%p139) target = $region20
        $region19: #{tpu_custom_call.1} parent=11 // pred_region
          %143 = vsyncadd [#allocation6], 0
          %s144 = sshll.u32 %s2, 4
          %s145 = int_to_ptr.hbm [resolvable:$true] %s144
          %s146 = sshll.u32 [#allocation7], 4
          %s147 = int_to_ptr.vmem [resolvable:$true] %s146
          %152 = dma.hbm_to_vmem [thread:$0]  %s145, 2048, %s147, [#allocation6], 128, 128, 8
        $region20: #{tpu_custom_call.1} parent=11 // pred_fallthru
          _
      $region12: #{tpu_custom_call.1} parent=5 // pred_fallthru
        _
      %p153 = scmp.lt.s32.totalorder %s16, 2
      // Predicated region
      $region21: #{tpu_custom_call.1} parent=5 // pred_check
        %p154 = pneg %p153
      $region22: #{tpu_custom_call.1} parent=5 // pred_check_branch
        %156 = sbr.rel (%p154) target = $region24
      $region23: #{tpu_custom_call.1} parent=5 // pred_region
        // Predicated region
        $region25: #{tpu_custom_call.1} parent=23 // pred_check
          %p157 = pneg %p36
        $region26: #{tpu_custom_call.1} parent=23 // pred_check_branch
          %159 = sbr.rel (%p157) target = $region28
        $region27: #{tpu_custom_call.1} parent=23 // pred_region
          %s160 = sand.u32 %s26, 1
          %s161 = scalar_lea.sflag [#allocation3], %s160
          %s162 = sand.u32 %s26, 1
          %s163 = smul.addr %s162, 8
          %s164 = scalar_lea.vmem [#allocation2], %s163
          %166 = vsyncadd %s161, 0
          %s167 = smul.addr %s16, 8
          %s168 = scalar_lea.hbm %s0, %s167
          %s170 = sshll.u32 %s168, 4
          %s171 = int_to_ptr.hbm [resolvable:$true] %s170
          %s172 = sshll.u32 %s164, 4
          %s173 = int_to_ptr.vmem [resolvable:$true] %s172
          %175 = dma.hbm_to_vmem [thread:$0]  %s171, 128, %s173, %s161
        $region28: #{tpu_custom_call.1} parent=23 // pred_fallthru
          _
      $region24: #{tpu_custom_call.1} parent=5 // pred_fallthru
        _
      %p176 = scmp.le.s32.totalorder 1, %s16
      %p177 = scmp.lt.s32.totalorder %s16, 3
      %p178 = pnand %p176, %p177
      %p179 = pneg %p178
      // Predicated region
      $region29: #{tpu_custom_call.1} parent=5 // pred_check
        _
      $region30: #{tpu_custom_call.1} parent=5 // pred_check_branch
        %181 = sbr.rel (%p178) target = $region32
      $region31: #{tpu_custom_call.1} parent=5 // pred_region
        %s182 = ssub.s32 %s16, 1
        %s183 = sand.u32 %s29, 1
        %s184 = scalar_lea.sflag [#allocation3], %s183
        %s185 = sand.u32 %s29, 1
        %s186 = smul.addr %s185, 8
        %s187 = scalar_lea.vmem [#allocation2], %s186
        // Predicated region
        $region33: #{tpu_custom_call.1} parent=31 // pred_check
          %p188 = pneg %p42
        $region34: #{tpu_custom_call.1} parent=31 // pred_check_branch
          %190 = sbr.rel (%p188) target = $region36
        $region35: #{tpu_custom_call.1} parent=31 // pred_region
          %192 = dma.done %s184, 128
        $region36: #{tpu_custom_call.1} parent=31 // pred_fallthru
          _
        // Predicated region
        $region37: #{tpu_custom_call.1} parent=31 // pred_check
          %p193 = pneg %p63
        $region38: #{tpu_custom_call.1} parent=31 // pred_check_branch
          %195 = sbr.rel (%p193) target = $region40
        $region39: #{tpu_custom_call.1} parent=31 // pred_region
          %197 = dma.done [#allocation6], 2048
        $region40: #{tpu_custom_call.1} parent=31 // pred_fallthru
          _
        // Predicated region
        $region41: #{tpu_custom_call.1} parent=31 // pred_check
          %p198 = pneg %p84
        $region42: #{tpu_custom_call.1} parent=31 // pred_check_branch
          %200 = sbr.rel (%p198) target = $region44
        $region43: #{tpu_custom_call.1} parent=31 // pred_region
          %202 = dma.done [#allocation6], 2048
        $region44: #{tpu_custom_call.1} parent=31 // pred_fallthru
          _
        %s203 = sand.u32 %s29, 1
        %s204 = scalar_lea.sflag [#allocation3], %s203
        %s205 = sand.u32 %s29, 1
        %s206 = smul.addr %s205, 8
        %s207 = scalar_lea.vmem [#allocation2], %s206
        %p208 = pneg %p42
        %p209 = pneg %p39
        %p210 = pneg %p63
        %p211 = pneg %p60
        %p212 = pneg %p84
        %p213 = pneg %p81
        %p214 = pneg %p110
        %p215 = pneg %p107
        %s216 = sand.u32 %s97, 1
        %s217 = scalar_lea.sflag [#allocation4], %s216
        %s218 = sand.u32 %s97, 1
        %s219 = smul.addr %s218, 8
        %s220 = scalar_lea.vmem [#allocation8], %s219
        %v221 = vld [vmem:[%s187] sm:$0xff]
        %v222 = vld [vmem:[#allocation5] sm:$0xff]
        %v223 = vld [vmem:[#allocation5 + $0x8] sm:$0xff]
        %v224 = vld [vmem:[#allocation5 + $0x10] sm:$0xff]
        %v225 = vld [vmem:[#allocation5 + $0x18] sm:$0xff]
        %v226 = vld [vmem:[#allocation5 + $0x20] sm:$0xff]
        %v227 = vld [vmem:[#allocation5 + $0x28] sm:$0xff]
        %v228 = vld [vmem:[#allocation5 + $0x30] sm:$0xff]
        %v229 = vld [vmem:[#allocation5 + $0x38] sm:$0xff]
        %v230 = vld [vmem:[#allocation5 + $0x40] sm:$0xff]
        %v231 = vld [vmem:[#allocation5 + $0x48] sm:$0xff]
        %v232 = vld [vmem:[#allocation5 + $0x50] sm:$0xff]
        %v233 = vld [vmem:[#allocation5 + $0x58] sm:$0xff]
        %v234 = vld [vmem:[#allocation5 + $0x60] sm:$0xff]
        %v235 = vld [vmem:[#allocation5 + $0x68] sm:$0xff]
        %v236 = vld [vmem:[#allocation5 + $0x70] sm:$0xff]
        %v237 = vld [vmem:[#allocation5 + $0x78] sm:$0xff]
        %238 = vmatpush.msra.mxu0 %v237
        %239 = vmatpush.msra.mxu0 %v236
        %240 = vmatpush.msra.mxu0 %v235
        %241 = vmatpush.msra.mxu0 %v234
        %242 = vmatpush.msra.mxu0 %v233
        %243 = vmatpush.msra.mxu0 %v232
        %244 = vmatpush.msra.mxu0 %v231
        %245 = vmatpush.msra.mxu0 %v230
        %246 = vmatpush.msra.mxu0 %v229
        %247 = vmatpush.msra.mxu0 %v228
        %248 = vmatpush.msra.mxu0 %v227
        %249 = vmatpush.msra.mxu0 %v226
        %250 = vmatpush.msra.mxu0 %v225
        %251 = vmatpush.msra.mxu0 %v224
        %252 = vmatpush.msra.mxu0 %v223
        %253 = vmatpush.msra.mxu0 %v222
        %254 = vmatmul.f32.gmra.mxu0 %v221
        %v255 = vpop.f32.mrf.mxu0
        %v256 = vadd.f32 0.0, %v255
        %257 = vdwg.mxu0
        %v258 = vmax.f32 %v256, 0.0
        %v259 = vld [vmem:[#allocation7] sm:$0xff]
        %v260 = vld [vmem:[#allocation7 + $0x8] sm:$0xff]
        %v261 = vld [vmem:[#allocation7 + $0x10] sm:$0xff]
        %v262 = vld [vmem:[#allocation7 + $0x18] sm:$0xff]
        %v263 = vld [vmem:[#allocation7 + $0x20] sm:$0xff]
        %v264 = vld [vmem:[#allocation7 + $0x28] sm:$0xff]
        %v265 = vld [vmem:[#allocation7 + $0x30] sm:$0xff]
        %v266 = vld [vmem:[#allocation7 + $0x38] sm:$0xff]
        %v267 = vld [vmem:[#allocation7 + $0x40] sm:$0xff]
        %v268 = vld [vmem:[#allocation7 + $0x48] sm:$0xff]
        %v269 = vld [vmem:[#allocation7 + $0x50] sm:$0xff]
        %v270 = vld [vmem:[#allocation7 + $0x58] sm:$0xff]
        %v271 = vld [vmem:[#allocation7 + $0x60] sm:$0xff]
        %v272 = vld [vmem:[#allocation7 + $0x68] sm:$0xff]
        %v273 = vld [vmem:[#allocation7 + $0x70] sm:$0xff]
        %v274 = vld [vmem:[#allocation7 + $0x78] sm:$0xff]
        %275 = vmatpush.msra.mxu0 %v274
        %276 = vmatpush.msra.mxu0 %v273
        %277 = vmatpush.msra.mxu0 %v272
        %278 = vmatpush.msra.mxu0 %v271
        %279 = vmatpush.msra.mxu0 %v270
        %280 = vmatpush.msra.mxu0 %v269
        %281 = vmatpush.msra.mxu0 %v268
        %282 = vmatpush.msra.mxu0 %v267
        %283 = vmatpush.msra.mxu0 %v266
        %284 = vmatpush.msra.mxu0 %v265
        %285 = vmatpush.msra.mxu0 %v264
        %286 = vmatpush.msra.mxu0 %v263
        %287 = vmatpush.msra.mxu0 %v262
        %288 = vmatpush.msra.mxu0 %v261
        %289 = vmatpush.msra.mxu0 %v260
        %290 = vmatpush.msra.mxu0 %v259
        %291 = vmatmul.f32.gmra.mxu0 %v258
        %v292 = vpop.f32.mrf.mxu0
        %v293 = vadd.f32 0.0, %v292
        %294 = vdwg.mxu0
        %295 = vst [vmem:[%s220] sm:$0xff] %v293
        %s296 = sand.u32 %s97, 1
        %s297 = scalar_lea.sflag [#allocation4], %s296
        %s298 = sand.u32 %s97, 1
        %s299 = smul.addr %s298, 8
        %s300 = scalar_lea.vmem [#allocation8], %s299
        // Predicated region
        $region45: #{tpu_custom_call.1} parent=31 // pred_check
          %p301 = pneg %p107
        $region46: #{tpu_custom_call.1} parent=31 // pred_check_branch
          %303 = sbr.rel (%p301) target = $region48
        $region47: #{tpu_custom_call.1} parent=31 // pred_region
          %305 = vsyncadd %s297, 0
          %s306 = smul.addr %s21, 8
          %s307 = scalar_lea.hbm %s3, %s306
          %s309 = sshll.u32 %s300, 4
          %s310 = int_to_ptr.vmem [resolvable:$true] %s309
          %s311 = sshll.u32 %s307, 4
          %s312 = int_to_ptr.hbm [resolvable:$true] %s311
          %314 = dma.vmem_to_hbm [thread:$0]  %s310, 128, %s312, %s297
        $region48: #{tpu_custom_call.1} parent=31 // pred_fallthru
          _
      $region32: #{tpu_custom_call.1} parent=5 // pred_fallthru
        _
      %p315 = scmp.le.s32.totalorder 2, %s16
      // Predicated region
      $region49: #{tpu_custom_call.1} parent=5 // pred_check
        %p316 = pneg %p315
      $region50: #{tpu_custom_call.1} parent=5 // pred_check_branch
        %318 = sbr.rel (%p316) target = $region52
      $region51: #{tpu_custom_call.1} parent=5 // pred_region
        %s319 = ssub.s32 %s16, 2
        // Predicated region
        $region53: #{tpu_custom_call.1} parent=51 // pred_check
          %p320 = pneg %p113
        $region54: #{tpu_custom_call.1} parent=51 // pred_check_branch
          %322 = sbr.rel (%p320) target = $region56
        $region55: #{tpu_custom_call.1} parent=51 // pred_region
          %s323 = sand.u32 %s98, 1
          %s324 = scalar_lea.sflag [#allocation4], %s323
          %s325 = sand.u32 %s98, 1
          %s326 = smul.addr %s325, 8
          %s327 = scalar_lea.vmem [#allocation8], %s326
          %329 = dma.done %s324, 128
        $region56: #{tpu_custom_call.1} parent=51 // pred_fallthru
          _
      $region52: #{tpu_custom_call.1} parent=5 // pred_fallthru
        _
    $region6: #{tpu_custom_call.1} parent=1 // loop_footer
      %s20 = sadd.s32 1, %s16
    $region7: #{tpu_custom_call.1} parent=1 // loop_footer_branch
      %15 = sbr.rel target = $region3
    $region8: #{tpu_custom_call.1} parent=1 // loop_exit
      _
    %330 = vsyncpa [#allocation3], 1
    %s331 = scalar_lea.sflag [#allocation3], 1
    %332 = vsyncpa %s331, 1
    %333 = vsyncpa [#allocation6], 1
    %334 = vsyncpa [#allocation4], 1
    %s335 = scalar_lea.sflag [#allocation4], 1
    %336 = vsyncpa %s335, 1

</llo_original>
